<compile_context>
chip_gen: v7x
topology: tpu7x:2x2x1
jax: 0.10.0
libtpu: 0.0.40
codegen_flags: <defaults>
</compile_context>

<pallas_src>
import functools

import jax
import jax.numpy as jnp
from jax.experimental import pallas as pl
from jax.experimental.pallas import tpu as pltpu

LANES = 128
SUBLANES = 8
CHUNK = SUBLANES * LANES          # 1024-element padding granularity
MAX_BLOCK_ROWS = 4096             # (4096, 128) f32 block = 2 MiB per input
NCORES = 2                        # leading "parallel" axis (v7x megacore split)
VMEM_LIMIT = 32 * 1024 * 1024     # safe on v5e/v6e (128 MiB phys) and v7x (64 MiB)


def _sum_kernel(x_ref, y_ref, out_ref, *, eps, block_rows, rows,
                blocks_total, blocks_per_core):
    """Accumulate (8,128) lane-partial sums of sqrt((x-y)^2 + eps^2)."""
    c = pl.program_id(0)                 # parallel (per-core) axis
    i = pl.program_id(1)                 # reduction axis (innermost, "arbitrary")
    g = c * blocks_per_core + i          # global row-block id

    @pl.when(i == 0)
    def _init():
        out_ref[...] = jnp.zeros_like(out_ref)

    eps2 = jnp.float32(eps) * jnp.float32(eps)

    def tile_partial(nrows):             # nrows: static Python int, multiple of 8
        xv = x_ref[:nrows, :].astype(jnp.float32)   # upcast in-kernel
        yv = y_ref[:nrows, :].astype(jnp.float32)
        d = xv - yv
        l = jnp.sqrt(d * d + eps2)
        # (nrows,128) -> (nrows//8, 8, 128): groups of 8 consecutive sublanes match
        # the native (8,128) vreg tiling, so the reshape is layout-trivial and the
        # axis-0 sum is pure VALU adds (no per-tile cross-lane XLU reduce).
        return jnp.sum(l.reshape(nrows // SUBLANES, SUBLANES, LANES), axis=0)

    tail_rows = rows - (blocks_total - 1) * block_rows   # static, multiple of 8
    has_tail = tail_rows != block_rows
    has_dead = blocks_per_core * NCORES != blocks_total  # grid-padding blocks to skip

    if not (has_tail or has_dead):
        out_ref[...] += tile_partial(block_rows)
    else:
        @pl.when(g < blocks_total - 1)
        def _body():
            out_ref[...] += tile_partial(block_rows)

        @pl.when(g == blocks_total - 1)
        def _tail():
            out_ref[...] += tile_partial(tail_rows)


def _elem_kernel(x_ref, y_ref, o_ref, *, eps):
    eps2 = jnp.float32(eps) * jnp.float32(eps)
    d = x_ref[...].astype(jnp.float32) - y_ref[...].astype(jnp.float32)
    o_ref[...] = jnp.sqrt(d * d + eps2).astype(o_ref.dtype)


def _as_slab(x, y):
    """Flatten to a lane-dense (rows, 128) slab; rows is a multiple of 8."""
    n = x.size
    xf = x.reshape(-1)
    yf = y.reshape(-1)
    pad = (-n) % CHUNK
    if pad:
        # Only hit when n % 1024 != 0; the pad copy is avoided in the common case.
        xf = jnp.pad(xf, (0, pad))
        yf = jnp.pad(yf, (0, pad))
    rows = (n + pad) // LANES
    return xf.reshape(rows, LANES), yf.reshape(rows, LANES), rows, pad


def _charbonnier_sum(x, y, eps):
    """Sum over all elements of sqrt((x-y)^2 + eps^2)."""
    x2, y2, rows, pad = _as_slab(x, y)
    block_rows = min(rows, MAX_BLOCK_ROWS)
    blocks_total = -(-rows // block_rows)
    blocks_per_core = -(-blocks_total // NCORES)

    def in_index(c, i):
        # Clamp so grid-padding ("dead") blocks never index past the array;
        # the kernel skips their contribution.
        return (jnp.minimum(c * blocks_per_core + i, blocks_total - 1), 0)

    kernel = functools.partial(
        _sum_kernel, eps=eps, block_rows=block_rows, rows=rows,
        blocks_total=blocks_total, blocks_per_core=blocks_per_core)

    partials = pl.pallas_call(
        kernel,
        out_shape=jax.ShapeDtypeStruct((NCORES * SUBLANES, LANES), jnp.float32),
        grid_spec=pltpu.PrefetchScalarGridSpec(
            num_scalar_prefetch=0,
            grid=(NCORES, blocks_per_core),
            in_specs=[
                pl.BlockSpec((block_rows, LANES), in_index),
                pl.BlockSpec((block_rows, LANES), in_index),
            ],
            out_specs=pl.BlockSpec((SUBLANES, LANES), lambda c, i: (c, 0)),
        ),
        compiler_params=pltpu.CompilerParams(
            dimension_semantics=("parallel", "arbitrary"),
            vmem_limit_bytes=VMEM_LIMIT,
        ),
    )(x2, y2)

    total = jnp.sum(partials, dtype=jnp.float32)
    if pad:
        # Each zero-padded element contributes exactly sqrt(eps^2) to the sum.
        total = total - jnp.float32(pad) * jnp.sqrt(jnp.float32(eps) * jnp.float32(eps))
    return total


def _charbonnier_elementwise(x, y, eps):
    out_dtype = jnp.result_type(x.dtype, y.dtype)
    if not jnp.issubdtype(out_dtype, jnp.floating):
        out_dtype = jnp.float32
    n = x.size
    x2, y2, rows, pad = _as_slab(x, y)
    block_rows = min(rows, MAX_BLOCK_ROWS)
    blocks_total = -(-rows // block_rows)

    out2 = pl.pallas_call(
        functools.partial(_elem_kernel, eps=eps),
        out_shape=jax.ShapeDtypeStruct((rows, LANES), out_dtype),
        grid_spec=pltpu.PrefetchScalarGridSpec(
            num_scalar_prefetch=0,
            grid=(blocks_total,),
            in_specs=[
                pl.BlockSpec((block_rows, LANES), lambda i: (i, 0)),
                pl.BlockSpec((block_rows, LANES), lambda i: (i, 0)),
            ],
            out_specs=pl.BlockSpec((block_rows, LANES), lambda i: (i, 0)),
        ),
        compiler_params=pltpu.CompilerParams(
            dimension_semantics=("parallel",),
            vmem_limit_bytes=VMEM_LIMIT,
        ),
    )(x2, y2)
    return out2.reshape(-1)[:n].reshape(x.shape)


def charbonnier_loss(x, y, *, eps=1e-3, size_average=True):
    assert x.shape == y.shape
    if size_average:
        total = _charbonnier_sum(x, y, eps)
        out_dtype = jnp.result_type(x.dtype, y.dtype)
        if not jnp.issubdtype(out_dtype, jnp.floating):
            out_dtype = jnp.float32
        return (total / jnp.float32(x.size)).astype(out_dtype)
    # size_average=False: return the per-element loss tensor (PyTorch semantics).
    return _charbonnier_elementwise(x, y, eps)


if __name__ == "__main__":
    eps = 1e-3

    def ref_loss(x, y, size_average=True):
        d = (x - y).astype(jnp.float32)
        l = jnp.sqrt(d * d + jnp.float32(eps) * jnp.float32(eps))
        return jnp.mean(l) if size_average else l

    keys = jax.random.split(jax.random.PRNGKey(0), 6)

    # 1) canonical small NCHW, size_average=True
    x1 = jax.random.normal(keys[0], (2, 4, 16, 16), dtype=jnp.float32)
    y1 = jax.random.normal(keys[1], (2, 4, 16, 16), dtype=jnp.float32)
    out1 = jax.block_until_ready(charbonnier_loss(x1, y1, eps=eps, size_average=True))
    assert jnp.allclose(out1, ref_loss(x1, y1), rtol=1e-5, atol=1e-6), (out1, ref_loss(x1, y1))

    # 2) size_average=False -> elementwise tensor
    out2 = jax.block_until_ready(charbonnier_loss(x1, y1, eps=eps, size_average=False))
    assert out2.shape == x1.shape
    assert jnp.allclose(out2, ref_loss(x1, y1, size_average=False), rtol=1e-5, atol=1e-6)

    # 3) odd size: exercises lane padding + eps correction path
    x3 = jax.random.normal(keys[2], (3, 5, 7, 11), dtype=jnp.float32)
    y3 = jax.random.normal(keys[3], (3, 5, 7, 11), dtype=jnp.float32)
    out3 = jax.block_until_ready(charbonnier_loss(x3, y3, eps=eps))
    assert jnp.allclose(out3, ref_loss(x3, y3), rtol=1e-5, atol=1e-6), (out3, ref_loss(x3, y3))

    # 4) multi-block: exercises tail block, dead-block guard and the core split
    x4 = jax.random.normal(keys[4], (2, 4, 384, 384), dtype=jnp.float32)
    y4 = jax.random.normal(keys[5], (2, 4, 384, 384), dtype=jnp.float32)
    out4 = jax.block_until_ready(charbonnier_loss(x4, y4, eps=eps))
    assert jnp.allclose(out4, ref_loss(x4, y4), rtol=1e-5, atol=1e-6), (out4, ref_loss(x4, y4))

    print("KERNEL_OK")
</pallas_src>

<mosaic_0001>
module attributes {stable_mosaic.version = 11 : i64} {
  func.func @_sum_kernel(%arg0: i32, %arg1: i32, %arg2: memref<16x128xf32, #tpu.memory_space<vmem>>, %arg3: memref<16x128xf32, #tpu.memory_space<vmem>>, %arg4: memref<8x128xf32, #tpu.memory_space<vmem>>) attributes {dimension_semantics = [#tpu.dimension_semantics<parallel>, #tpu.dimension_semantics<arbitrary>], iteration_bounds = array<i64: 2, 1>, scalar_prefetch = 0 : i64, scratch_operands = 0 : i64, tpu.core_type = #tpu.core_type<tc>, window_params = [{transform_indices = @transform_0, window_bounds = array<i64: 16, 128>}, {transform_indices = @transform_1, window_bounds = array<i64: 16, 128>}, {transform_indices = @transform_2, window_bounds = array<i64: 8, 128>}]} {
    %c1_i32 = arith.constant 1 : i32
    %0 = arith.muli %arg0, %c1_i32 : i32
    %1 = arith.addi %0, %arg1 : i32
    %c0_i32 = arith.constant 0 : i32
    %2 = arith.cmpi eq, %arg1, %c0_i32 : i32
    %3 = arith.extui %2 : i1 to i32
    %c0_i32_0 = arith.constant 0 : i32
    %4 = arith.cmpi ne, %3, %c0_i32_0 : i32
    scf.if %4 {
      %cst_6 = arith.constant 0.000000e+00 : f32
      %12 = vector.broadcast %cst_6 : f32 to vector<8x128xf32>
      %c0 = arith.constant 0 : index
      %c0_7 = arith.constant 0 : index
      %13 = vector.load %arg4[%c0, %c0_7] : memref<8x128xf32, #tpu.memory_space<vmem>>, vector<8x128xf32>
      tpu.vector_store %arg4[%c0, %c0_7], %12 {strides = array<i32>} : memref<8x128xf32, #tpu.memory_space<vmem>>, vector<8x128xf32>,
    } else {
    }
    %cst = arith.constant 1.000000e-03 : f32
    %cst_1 = arith.constant 1.000000e-03 : f32
    %5 = arith.mulf %cst, %cst_1 : f32
    %c0_i32_2 = arith.constant 0 : i32
    %6 = arith.cmpi slt, %1, %c0_i32_2 : i32
    %7 = arith.extui %6 : i1 to i32
    %c0_i32_3 = arith.constant 0 : i32
    %8 = arith.cmpi ne, %7, %c0_i32_3 : i32
    scf.if %8 {
      %c0 = arith.constant 0 : index
      %c0_6 = arith.constant 0 : index
      %12 = vector.load %arg4[%c0, %c0_6] : memref<8x128xf32, #tpu.memory_space<vmem>>, vector<8x128xf32>
      %c0_7 = arith.constant 0 : index
      %c0_8 = arith.constant 0 : index
      %13 = vector.load %arg2[%c0_7, %c0_8] : memref<16x128xf32, #tpu.memory_space<vmem>>, vector<16x128xf32>
      %c0_9 = arith.constant 0 : index
      %c0_10 = arith.constant 0 : index
      %14 = vector.load %arg3[%c0_9, %c0_10] : memref<16x128xf32, #tpu.memory_space<vmem>>, vector<16x128xf32>
      %15 = arith.subf %13, %14 : vector<16x128xf32>
      %16 = arith.mulf %15, %15 : vector<16x128xf32>
      %17 = vector.broadcast %5 : f32 to vector<16x128xf32>
      %18 = arith.addf %16, %17 : vector<16x128xf32>
      %19 = math.sqrt %18 : vector<16x128xf32>
      %20 = vector.shape_cast %19 : vector<16x128xf32> to vector<2x8x128xf32>
      %cst_11 = arith.constant dense<0.000000e+00> : vector<8x128xf32>
      %21 = vector.multi_reduction <add>, %20, %cst_11 [0] : vector<2x8x128xf32> to vector<8x128xf32>
      %22 = arith.addf %12, %21 : vector<8x128xf32>
      %c0_12 = arith.constant 0 : index
      %c0_13 = arith.constant 0 : index
      %23 = vector.load %arg4[%c0_12, %c0_13] : memref<8x128xf32, #tpu.memory_space<vmem>>, vector<8x128xf32>
      tpu.vector_store %arg4[%c0_12, %c0_13], %22 {strides = array<i32>} : memref<8x128xf32, #tpu.memory_space<vmem>>, vector<8x128xf32>,
    } else {
    }
    %c0_i32_4 = arith.constant 0 : i32
    %9 = arith.cmpi eq, %1, %c0_i32_4 : i32
    %10 = arith.extui %9 : i1 to i32
    %c0_i32_5 = arith.constant 0 : i32
    %11 = arith.cmpi ne, %10, %c0_i32_5 : i32
    scf.if %11 {
      %c0 = arith.constant 0 : index
      %c0_6 = arith.constant 0 : index
      %12 = vector.load %arg4[%c0, %c0_6] : memref<8x128xf32, #tpu.memory_space<vmem>>, vector<8x128xf32>
      %c0_7 = arith.constant 0 : index
      %c0_8 = arith.constant 0 : index
      %13 = vector.load %arg2[%c0_7, %c0_8] : memref<16x128xf32, #tpu.memory_space<vmem>>, vector<16x128xf32>
      %c0_9 = arith.constant 0 : index
      %c0_10 = arith.constant 0 : index
      %14 = vector.load %arg3[%c0_9, %c0_10] : memref<16x128xf32, #tpu.memory_space<vmem>>, vector<16x128xf32>
      %15 = arith.subf %13, %14 : vector<16x128xf32>
      %16 = arith.mulf %15, %15 : vector<16x128xf32>
      %17 = vector.broadcast %5 : f32 to vector<16x128xf32>
      %18 = arith.addf %16, %17 : vector<16x128xf32>
      %19 = math.sqrt %18 : vector<16x128xf32>
      %20 = vector.shape_cast %19 : vector<16x128xf32> to vector<2x8x128xf32>
      %cst_11 = arith.constant dense<0.000000e+00> : vector<8x128xf32>
      %21 = vector.multi_reduction <add>, %20, %cst_11 [0] : vector<2x8x128xf32> to vector<8x128xf32>
      %22 = arith.addf %12, %21 : vector<8x128xf32>
      %c0_12 = arith.constant 0 : index
      %c0_13 = arith.constant 0 : index
      %23 = vector.load %arg4[%c0_12, %c0_13] : memref<8x128xf32, #tpu.memory_space<vmem>>, vector<8x128xf32>
      tpu.vector_store %arg4[%c0_12, %c0_13], %22 {strides = array<i32>} : memref<8x128xf32, #tpu.memory_space<vmem>>, vector<8x128xf32>,
    } else {
    }
    return
  }
  func.func @transform_0(%arg0: i32, %arg1: i32) -> (i32, i32) {
    %c1_i32 = arith.constant 1 : i32
    %0 = arith.muli %arg0, %c1_i32 : i32
    %1 = arith.addi %0, %arg1 : i32
    %c0_i32 = arith.constant 0 : i32
    %2 = arith.minsi %1, %c0_i32 : i32
    %c0_i32_0 = arith.constant 0 : i32
    %c0_i32_1 = arith.constant 0 : i32
    return %2, %c0_i32_0 : i32, i32
  }
  func.func @transform_1(%arg0: i32, %arg1: i32) -> (i32, i32) {
    %c1_i32 = arith.constant 1 : i32
    %0 = arith.muli %arg0, %c1_i32 : i32
    %1 = arith.addi %0, %arg1 : i32
    %c0_i32 = arith.constant 0 : i32
    %2 = arith.minsi %1, %c0_i32 : i32
    %c0_i32_0 = arith.constant 0 : i32
    %c0_i32_1 = arith.constant 0 : i32
    return %2, %c0_i32_0 : i32, i32
  }
  func.func @transform_2(%arg0: i32, %arg1: i32) -> (i32, i32) {
    %c0_i32 = arith.constant 0 : i32
    %c0_i32_0 = arith.constant 0 : i32
    return %arg0, %c0_i32 : i32, i32
  }
}

</mosaic_0001>

<llo_original>
// kernel: tpu_custom_call.1
$region0: #{tpu_custom_call.1}
  #allocation0 [shape = 'u32[]', space=smem, size = 0x4, offset = 0x4, fixed_abs, tag = 'smem constant byte address 0x4 - core index']
  #allocation1 [shape = 'u32[144,128]{1,0:T(1,128)}', space=vmem, size = 0x12000, scoped, tag = 'internal scratch']
  %s0 = inlined_call_operand.hbm [shape: f32[16,128], index: 0, kind: input, shape index: {}]
  %s1 = inlined_call_operand.hbm [shape: f32[16,128], index: 1, kind: input, shape index: {}]
  %s2 = inlined_call_operand.hbm [shape: f32[16,128], index: 2, kind: output, shape index: {}]
  %s3 = sld [smem:[#allocation0]]
  $region61: #{tpu_custom_call.1} parent=0
    _
  %s5 = ssub.s32 1, %s3
  %s6 = scalar_select 0, %s5, %s3
  $region1: #{tpu_custom_call.1} parent=0
    #allocation2 [shape = 'u8[16384]{0}', space=vmem, size = 0x4000, scoped, tag = 'input window, operand 0']
    #allocation3 [shape = 's32[2]{0}', space=sflag, size = 0x8, scoped, tag = 'scoped memory for tpu_custom_call.1']
    #allocation4 [shape = 's32[2]{0}', space=sflag, size = 0x8, scoped, tag = 'scoped memory for tpu_custom_call.1']
    #allocation5 [shape = 'u8[16384]{0}', space=vmem, size = 0x4000, scoped, tag = 'input window, operand 1']
    #allocation6 [shape = 's32[2]{0}', space=sflag, size = 0x8, scoped, tag = 'scoped memory for tpu_custom_call.1']
    #allocation7 [shape = 'u8[8192]{0}', space=vmem, size = 0x2000, scoped, tag = 'output window, operand 0']
    %7 = vsyncpa [#allocation3], 0
    %s8 = scalar_lea.sflag [#allocation3], 1
    %9 = vsyncpa %s8, 0
    %10 = vsyncpa [#allocation6], 0
    %s11 = scalar_lea.sflag [#allocation6], 1
    %12 = vsyncpa %s11, 0
    %13 = vsyncpa [#allocation4], 0
    %s14 = scalar_lea.sflag [#allocation4], 1
    %15 = vsyncpa %s14, 0
    loop: start=0, step=1, limit=4
    $region2: #{tpu_custom_call.1} parent=1 // loop_pre_header
      _
    $region3: #{tpu_custom_call.1} parent=1 // loop_header
      %s17 = sphi 0, %s21
      %p18 = scmp.ge.s32.totalorder %s17, 4
      %s24 = sphi 0, %s36
      %s25 = sphi 0, %s32
      %s26 = sphi 0, %s24
      %s27 = sphi 0, %s25
      %s28 = sphi 0, %s26
      %s29 = sphi 0, %s27
      %s45 = sphi 0, %s47
      %s48 = sphi 0, %s45
      %s49 = sphi 0, %s48
      %s65 = sphi 0, %s49
      %s77 = sphi 0, %s79
      %s80 = sphi 0, %s77
      %s81 = sphi 0, %s80
      %s97 = sphi 0, %s81
      %s103 = sphi 0, %s105
      %s106 = sphi 0, %s103
      %s107 = sphi 0, %s106
      %s123 = sphi 0, %s107
    $region4: #{tpu_custom_call.1} parent=1 // loop_header_branch
      %20 = sbr.rel (%p18) target = $region8
    $region5: #{tpu_custom_call.1} parent=1 // loop_body
      %s22 = ssub.s32 %s17, 1
      %s23 = ssub.s32 %s17, 2
      %s30 = sadd.s32 1, %s25
      %p31 = scmp.ge.s32.totalorder %s30, 1
      %s32 = scalar_select %p31, 0, %s30
      %s33 = sadd.s32 1, %s24
      %s34 = scalar_select %p31, %s33, %s24
      %p35 = scmp.ge.s32.totalorder %s34, 2
      %s36 = scalar_select %p35, 0, %s34
      %s37 = sadd.s32 %s24, %s25
      %p38 = scmp.lt.s32.totalorder %s37, 0
      %s39 = scalar_select %p38, %s37, 0
      %s40 = sadd.s32 %s36, %s32
      %p41 = scmp.lt.s32.totalorder %s40, 0
      %s42 = scalar_select %p41, %s40, 0
      %s43 = ssub.s32 %s39, %s42
      %p44 = scmp.eq.s32.totalorder %s43, 0
      %s46 = sadd.s32 %s45, 1
      %s47 = scalar_select %p44, %s45, %s46
      %p50 = pneg %p44
      %p51 = scmp.eq.s32.totalorder %s17, 1
      %p52 = por %p50, %p51
      %p53 = scmp.ne.s32.totalorder %s45, %s48
      %p54 = scmp.eq.s32.totalorder %s17, 0
      %p55 = por %p53, %p54
      %p56 = scmp.ne.s32.totalorder %s45, %s48
      %p57 = scmp.eq.s32.totalorder %s22, 1
      %p58 = por %p56, %p57
      %p59 = scmp.ne.s32.totalorder %s48, %s49
      %p60 = scmp.eq.s32.totalorder %s22, 0
      %p61 = por %p59, %p60
      %p62 = scmp.ne.s32.totalorder %s48, %s49
      %p63 = scmp.eq.s32.totalorder %s23, 1
      %p64 = por %p62, %p63
      %p66 = scmp.ne.s32.totalorder %s49, %s65
      %p67 = scmp.eq.s32.totalorder %s23, 0
      %p68 = por %p66, %p67
      %s69 = sadd.s32 %s24, %s25
      %p70 = scmp.lt.s32.totalorder %s69, 0
      %s71 = scalar_select %p70, %s69, 0
      %s72 = sadd.s32 %s36, %s32
      %p73 = scmp.lt.s32.totalorder %s72, 0
      %s74 = scalar_select %p73, %s72, 0
      %s75 = ssub.s32 %s71, %s74
      %p76 = scmp.eq.s32.totalorder %s75, 0
      %s78 = sadd.s32 %s77, 1
      %s79 = scalar_select %p76, %s77, %s78
      %p82 = pneg %p76
      %p83 = scmp.eq.s32.totalorder %s17, 1
      %p84 = por %p82, %p83
      %p85 = scmp.ne.s32.totalorder %s77, %s80
      %p86 = scmp.eq.s32.totalorder %s17, 0
      %p87 = por %p85, %p86
      %p88 = scmp.ne.s32.totalorder %s77, %s80
      %p89 = scmp.eq.s32.totalorder %s22, 1
      %p90 = por %p88, %p89
      %p91 = scmp.ne.s32.totalorder %s80, %s81
      %p92 = scmp.eq.s32.totalorder %s22, 0
      %p93 = por %p91, %p92
      %p94 = scmp.ne.s32.totalorder %s80, %s81
      %p95 = scmp.eq.s32.totalorder %s23, 1
      %p96 = por %p94, %p95
      %p98 = scmp.ne.s32.totalorder %s81, %s97
      %p99 = scmp.eq.s32.totalorder %s23, 0
      %p100 = por %p98, %p99
      %s101 = ssub.s32 %s24, %s36
      %p102 = scmp.eq.s32.totalorder %s101, 0
      %s104 = sadd.s32 %s103, 1
      %s105 = scalar_select %p102, %s103, %s104
      %p108 = pneg %p102
      %p109 = scmp.eq.s32.totalorder %s17, 1
      %p110 = por %p108, %p109
      %p111 = scmp.ne.s32.totalorder %s103, %s106
      %p112 = scmp.eq.s32.totalorder %s17, 0
      %p113 = por %p111, %p112
      %p114 = scmp.ne.s32.totalorder %s103, %s106
      %p115 = scmp.eq.s32.totalorder %s22, 1
      %p116 = por %p114, %p115
      %p117 = scmp.ne.s32.totalorder %s106, %s107
      %p118 = scmp.eq.s32.totalorder %s22, 0
      %p119 = por %p117, %p118
      %p120 = scmp.ne.s32.totalorder %s106, %s107
      %p121 = scmp.eq.s32.totalorder %s23, 1
      %p122 = por %p120, %p121
      %p124 = scmp.ne.s32.totalorder %s107, %s123
      %p125 = scmp.eq.s32.totalorder %s23, 0
      %p126 = por %p124, %p125
      %p127 = scmp.le.s32.totalorder 1, %s17
      %p128 = scmp.lt.s32.totalorder %s17, 3
      %p129 = pnand %p127, %p128
      %p130 = pneg %p129
      // Predicated region
      $region9: #{tpu_custom_call.1} parent=5 // pred_check
        _
      $region10: #{tpu_custom_call.1} parent=5 // pred_check_branch
        %132 = sbr.rel (%p129) target = $region12
      $region11: #{tpu_custom_call.1} parent=5 // pred_region
        %s133 = ssub.s32 %s17, 1
      $region12: #{tpu_custom_call.1} parent=5 // pred_fallthru
        _
      %p134 = scmp.lt.s32.totalorder %s17, 2
      // Predicated region
      $region13: #{tpu_custom_call.1} parent=5 // pred_check
        %p135 = pneg %p134
      $region14: #{tpu_custom_call.1} parent=5 // pred_check_branch
        %137 = sbr.rel (%p135) target = $region16
      $region15: #{tpu_custom_call.1} parent=5 // pred_region
        // Predicated region
        $region17: #{tpu_custom_call.1} parent=15 // pred_check
          %p138 = pneg %p55
        $region18: #{tpu_custom_call.1} parent=15 // pred_check_branch
          %140 = sbr.rel (%p138) target = $region20
        $region19: #{tpu_custom_call.1} parent=15 // pred_region
          %s141 = sand.u32 %s45, 1
          %s142 = scalar_lea.sflag [#allocation3], %s141
          %s143 = sand.u32 %s45, 1
          %s144 = smul.addr %s143, 16
          %s145 = scalar_lea.vmem [#allocation2], %s144
          %s146 = sadd.s32 %s24, %s25
          %p147 = scmp.lt.s32.totalorder %s146, 0
          %s148 = scalar_select %p147, %s146, 0
          %s149 = smul.u32 2, %s148
          %s151 = ssub.s32 256, 256
          %152 = vsyncadd %s142, %s151
          %s153 = smul.addr %s149, 128
          %s154 = scalar_lea.hbm %s0, %s153
          %s155 = sshll.u32 %s145, 4
          %s156 = int_to_ptr.vmem [resolvable:$true] %s155
          %161 = dma.hbm_to_vmem [thread:$0]  %s154, 256, %s156, %s142, 128, 128, 8
        $region20: #{tpu_custom_call.1} parent=15 // pred_fallthru
          _
        // Predicated region
        $region21: #{tpu_custom_call.1} parent=15 // pred_check
          %p162 = pneg %p87
        $region22: #{tpu_custom_call.1} parent=15 // pred_check_branch
          %164 = sbr.rel (%p162) target = $region24
        $region23: #{tpu_custom_call.1} parent=15 // pred_region
          %s165 = sand.u32 %s77, 1
          %s166 = scalar_lea.sflag [#allocation6], %s165
          %s167 = sand.u32 %s77, 1
          %s168 = smul.addr %s167, 16
          %s169 = scalar_lea.vmem [#allocation5], %s168
          %s170 = sadd.s32 %s24, %s25
          %p171 = scmp.lt.s32.totalorder %s170, 0
          %s172 = scalar_select %p171, %s170, 0
          %s173 = smul.u32 2, %s172
          %s175 = ssub.s32 256, 256
          %176 = vsyncadd %s166, %s175
          %s177 = smul.addr %s173, 128
          %s178 = scalar_lea.hbm %s1, %s177
          %s179 = sshll.u32 %s169, 4
          %s180 = int_to_ptr.vmem [resolvable:$true] %s179
          %185 = dma.hbm_to_vmem [thread:$0]  %s178, 256, %s180, %s166, 128, 128, 8
        $region24: #{tpu_custom_call.1} parent=15 // pred_fallthru
          _
      $region16: #{tpu_custom_call.1} parent=5 // pred_fallthru
        _
      %p186 = scmp.le.s32.totalorder 1, %s17
      %p187 = scmp.lt.s32.totalorder %s17, 3
      %p188 = pnand %p186, %p187
      %p189 = pneg %p188
      // Predicated region
      $region25: #{tpu_custom_call.1} parent=5 // pred_check
        _
      $region26: #{tpu_custom_call.1} parent=5 // pred_check_branch
        %191 = sbr.rel (%p188) target = $region28
      $region27: #{tpu_custom_call.1} parent=5 // pred_region
        %s192 = ssub.s32 %s17, 1
        %s193 = sand.u32 %s48, 1
        %s194 = scalar_lea.sflag [#allocation3], %s193
        %s195 = sand.u32 %s48, 1
        %s196 = smul.addr %s195, 16
        %s197 = scalar_lea.vmem [#allocation2], %s196
        // Predicated region
        $region29: #{tpu_custom_call.1} parent=27 // pred_check
          %p198 = pneg %p61
        $region30: #{tpu_custom_call.1} parent=27 // pred_check_branch
          %200 = sbr.rel (%p198) target = $region32
        $region31: #{tpu_custom_call.1} parent=27 // pred_region
          %201 = dma.done %s194, 256
        $region32: #{tpu_custom_call.1} parent=27 // pred_fallthru
          _
        %s202 = sand.u32 %s80, 1
        %s203 = scalar_lea.sflag [#allocation6], %s202
        %s204 = sand.u32 %s80, 1
        %s205 = smul.addr %s204, 16
        %s206 = scalar_lea.vmem [#allocation5], %s205
        // Predicated region
        $region33: #{tpu_custom_call.1} parent=27 // pred_check
          %p207 = pneg %p93
        $region34: #{tpu_custom_call.1} parent=27 // pred_check_branch
          %209 = sbr.rel (%p207) target = $region36
        $region35: #{tpu_custom_call.1} parent=27 // pred_region
          %210 = dma.done %s203, 256
        $region36: #{tpu_custom_call.1} parent=27 // pred_fallthru
          _
        %s211 = sand.u32 %s48, 1
        %s212 = scalar_lea.sflag [#allocation3], %s211
        %s213 = sand.u32 %s48, 1
        %s214 = smul.addr %s213, 16
        %s215 = scalar_lea.vmem [#allocation2], %s214
        %p216 = pneg %p61
        %p217 = pneg %p58
        %s218 = sand.u32 %s80, 1
        %s219 = scalar_lea.sflag [#allocation6], %s218
        %s220 = sand.u32 %s80, 1
        %s221 = smul.addr %s220, 16
        %s222 = scalar_lea.vmem [#allocation5], %s221
        %p223 = pneg %p93
        %p224 = pneg %p90
        %p225 = pneg %p119
        %p226 = pneg %p116
        %s227 = sand.u32 %s106, 1
        %s228 = scalar_lea.sflag [#allocation4], %s227
        %s229 = sand.u32 %s106, 1
        %s230 = smul.addr %s229, 8
        %s231 = scalar_lea.vmem [#allocation7], %s230
        %s232 = sadd.s32 %s26, %s27
        %p233 = scmp.lt.s32.totalorder %s232, 0
        %s234 = scalar_select %p233, %s232, 0
        %s235 = smul.u32 2, %s234
        %s236 = sadd.s32 %s26, %s27
        %p237 = scmp.lt.s32.totalorder %s236, 0
        %s238 = scalar_select %p237, %s236, 0
        %s239 = smul.u32 2, %s238
        %s240 = sadd.s32 %s26, %s27
        %p241 = scmp.eq.s32.totalorder %s27, 0
        // Predicated region
        $region37: #{tpu_custom_call.1} parent=27 // pred_check
          %p242 = pneg %p241
        $region38: #{tpu_custom_call.1} parent=27 // pred_check_branch
          %244 = sbr.rel (%p242) target = $region40
        $region39: #{tpu_custom_call.1} parent=27 // pred_region
          %245 = vst [vmem:[%s231] sm:$0xff] 0.0
        $region40: #{tpu_custom_call.1} parent=27 // pred_fallthru
          _
        %p246 = scmp.lt.s32.totalorder %s240, 0
        // Predicated region
        $region41: #{tpu_custom_call.1} parent=27 // pred_check
          %p247 = pneg %p246
        $region42: #{tpu_custom_call.1} parent=27 // pred_check_branch
          %249 = sbr.rel (%p247) target = $region44
        $region43: #{tpu_custom_call.1} parent=27 // pred_region
          %v250 = vld [vmem:[%s231] sm:$0xff]
          %v251 = vld [vmem:[%s197] sm:$0xff]
          %v252 = vld [vmem:[%s197 + $0x8] sm:$0xff]
          %v253 = vld [vmem:[%s206] sm:$0xff]
          %v254 = vld [vmem:[%s206 + $0x8] sm:$0xff]
          %v255 = vsub.f32 %v251, %v253
          %v256 = vsub.f32 %v252, %v254
          %v257 = vmul.f32 %v255, %v255
          %v258 = vmul.f32 %v256, %v256
          %v259 = vadd.f32 %v257, 1.0000001e-06
          %v260 = vadd.f32 %v258, 1.0000001e-06
          %v261 = vrsqrt.pop %v259
          %v262 = vmul.f32 %v259, %v261
          %vm263 = vcmp.eq.f32.partialorder %v259, inf
          %v264 = vsel %vm263, %v259, %v262
          %vm265 = vcmp.eq.f32.partialorder %v259, 0.0
          %v266 = vand.u32 %v259, 2147483648
          %v267 = vsel %vm265, %v266, %v264
          %v268 = vrsqrt.pop %v260
          %v269 = vmul.f32 %v260, %v268
          %vm270 = vcmp.eq.f32.partialorder %v260, inf
          %v271 = vsel %vm270, %v260, %v269
          %vm272 = vcmp.eq.f32.partialorder %v260, 0.0
          %v273 = vand.u32 %v260, 2147483648
          %v274 = vsel %vm272, %v273, %v271
          %v275 = vadd.f32 %v267, %v274
          %v276 = vadd.f32 %v250, %v275
          %277 = vst [vmem:[%s231] sm:$0xff] %v276
        $region44: #{tpu_custom_call.1} parent=27 // pred_fallthru
          _
        %p278 = scmp.eq.s32.totalorder %s240, 0
        // Predicated region
        $region45: #{tpu_custom_call.1} parent=27 // pred_check
          %p279 = pneg %p278
        $region46: #{tpu_custom_call.1} parent=27 // pred_check_branch
          %281 = sbr.rel (%p279) target = $region48
        $region47: #{tpu_custom_call.1} parent=27 // pred_region
          %v282 = vld [vmem:[%s231] sm:$0xff]
          %v283 = vld [vmem:[%s197] sm:$0xff]
          %v284 = vld [vmem:[%s197 + $0x8] sm:$0xff]
          %v285 = vld [vmem:[%s206] sm:$0xff]
          %v286 = vld [vmem:[%s206 + $0x8] sm:$0xff]
          %v287 = vsub.f32 %v283, %v285
          %v288 = vsub.f32 %v284, %v286
          %v289 = vmul.f32 %v287, %v287
          %v290 = vmul.f32 %v288, %v288
          %v291 = vadd.f32 %v289, 1.0000001e-06
          %v292 = vadd.f32 %v290, 1.0000001e-06
          %v293 = vrsqrt.pop %v291
          %v294 = vmul.f32 %v291, %v293
          %vm295 = vcmp.eq.f32.partialorder %v291, inf
          %v296 = vsel %vm295, %v291, %v294
          %vm297 = vcmp.eq.f32.partialorder %v291, 0.0
          %v298 = vand.u32 %v291, 2147483648
          %v299 = vsel %vm297, %v298, %v296
          %v300 = vrsqrt.pop %v292
          %v301 = vmul.f32 %v292, %v300
          %vm302 = vcmp.eq.f32.partialorder %v292, inf
          %v303 = vsel %vm302, %v292, %v301
          %vm304 = vcmp.eq.f32.partialorder %v292, 0.0
          %v305 = vand.u32 %v292, 2147483648
          %v306 = vsel %vm304, %v305, %v303
          %v307 = vadd.f32 %v299, %v306
          %v308 = vadd.f32 %v282, %v307
          %309 = vst [vmem:[%s231] sm:$0xff] %v308
        $region48: #{tpu_custom_call.1} parent=27 // pred_fallthru
          _
        %s310 = sand.u32 %s106, 1
        %s311 = scalar_lea.sflag [#allocation4], %s310
        %s312 = sand.u32 %s106, 1
        %s313 = smul.addr %s312, 8
        %s314 = scalar_lea.vmem [#allocation7], %s313
        // Predicated region
        $region49: #{tpu_custom_call.1} parent=27 // pred_check
          %p315 = pneg %p116
        $region50: #{tpu_custom_call.1} parent=27 // pred_check_branch
          %317 = sbr.rel (%p315) target = $region52
        $region51: #{tpu_custom_call.1} parent=27 // pred_region
          %s319 = ssub.s32 128, 128
          %320 = vsyncadd %s311, %s319
          %s321 = smul.addr %s26, 128
          %s322 = scalar_lea.hbm %s2, %s321
          %s324 = sshll.u32 %s314, 4
          %s325 = int_to_ptr.vmem [resolvable:$true] %s324
          %327 = dma.vmem_to_hbm [thread:$0]  %s325, 128, %s322, %s311
        $region52: #{tpu_custom_call.1} parent=27 // pred_fallthru
          _
      $region28: #{tpu_custom_call.1} parent=5 // pred_fallthru
        _
      %p328 = scmp.le.s32.totalorder 2, %s17
      // Predicated region
      $region53: #{tpu_custom_call.1} parent=5 // pred_check
        %p329 = pneg %p328
      $region54: #{tpu_custom_call.1} parent=5 // pred_check_branch
        %331 = sbr.rel (%p329) target = $region56
      $region55: #{tpu_custom_call.1} parent=5 // pred_region
        %s332 = ssub.s32 %s17, 2
        // Predicated region
        $region57: #{tpu_custom_call.1} parent=55 // pred_check
          %p333 = pneg %p122
        $region58: #{tpu_custom_call.1} parent=55 // pred_check_branch
          %335 = sbr.rel (%p333) target = $region60
        $region59: #{tpu_custom_call.1} parent=55 // pred_region
          %s336 = sand.u32 %s107, 1
          %s337 = scalar_lea.sflag [#allocation4], %s336
          %s338 = sand.u32 %s107, 1
          %s339 = smul.addr %s338, 8
          %s340 = scalar_lea.vmem [#allocation7], %s339
          %341 = dma.done %s337, 128
        $region60: #{tpu_custom_call.1} parent=55 // pred_fallthru
          _
      $region56: #{tpu_custom_call.1} parent=5 // pred_fallthru
        _
    $region6: #{tpu_custom_call.1} parent=1 // loop_footer
      %s21 = sadd.s32 1, %s17
    $region7: #{tpu_custom_call.1} parent=1 // loop_footer_branch
      %16 = sbr.rel target = $region3
    $region8: #{tpu_custom_call.1} parent=1 // loop_exit
      _
    %342 = vsyncpa [#allocation3], 1
    %s343 = scalar_lea.sflag [#allocation3], 1
    %344 = vsyncpa %s343, 1
    %345 = vsyncpa [#allocation6], 1
    %s346 = scalar_lea.sflag [#allocation6], 1
    %347 = vsyncpa %s346, 1
    %348 = vsyncpa [#allocation4], 1
    %s349 = scalar_lea.sflag [#allocation4], 1
    %350 = vsyncpa %s349, 1

</llo_original>
